<compile_context>
chip_gen: v7x
topology: tpu7x:2x2x1
jax: 0.10.0
libtpu: 0.0.40
codegen_flags: <defaults>
</compile_context>

<pallas_src>
import functools
import math

import numpy as np
import jax
import jax.numpy as jnp
from jax import lax
from jax.experimental import pallas as pl
from jax.experimental.pallas import tpu as pltpu


_NEG_BIG = -1e9            # finite "minus infinity" for key masking (avoids inf-inf NaNs)
_ROW_INIT = -1e30          # init value for the running row max
_VMEM_LIMIT = 32 * 1024 * 1024   # explicit scoped-VMEM budget (safe on v5e/v6e/v7x)


def _tile(dim, preferred, align):
    """Largest tile t <= preferred with t % align == 0 and dim % t == 0, else the full dim."""
    t = min(preferred, dim)
    t = (t // align) * align
    while t >= align:
        if dim % t == 0:
            return t
        t -= align
    return dim


# ------------------------- fused QKV projection kernel -------------------------------


def _fused_qkv_kernel(x_ref, w_ref, b_ref, q_ref, k_ref, v_ref, acc_q, acc_k, acc_v):
    kk = pl.program_id(2)

    @pl.when(kk == 0)
    def _init():
        acc_q[...] = jnp.zeros_like(acc_q)
        acc_k[...] = jnp.zeros_like(acc_k)
        acc_v[...] = jnp.zeros_like(acc_v)

    x = x_ref[...]                                                     # (tm, tk) bf16
    acc_q[...] += jnp.dot(x, w_ref[0], preferred_element_type=jnp.float32)
    acc_k[...] += jnp.dot(x, w_ref[1], preferred_element_type=jnp.float32)
    acc_v[...] += jnp.dot(x, w_ref[2], preferred_element_type=jnp.float32)

    @pl.when(kk == pl.num_programs(2) - 1)
    def _finalize():
        q_ref[...] = (acc_q[...] + b_ref[0]).astype(q_ref.dtype)
        k_ref[...] = (acc_k[...] + b_ref[1]).astype(k_ref.dtype)
        v_ref[...] = (acc_v[...] + b_ref[2]).astype(v_ref.dtype)


def fused_qkv_projection(x, w_stacked, b_stacked, *, out_dtype=jnp.bfloat16,
                         tm_pref=256, tn_pref=256, tk_pref=512):
    """x: (M, K) bf16; w_stacked: (3, K, N) bf16; b_stacked: (3, 1, N) f32.
    Returns (q, k, v), each (M, N) in `out_dtype`. x is streamed once for all three."""
    M, K = x.shape
    _, _, N = w_stacked.shape
    tm = _tile(M, tm_pref, 8)
    tn = _tile(N, tn_pref, 128)
    tk = _tile(K, tk_pref, 128)
    grid = (M // tm, N // tn, K // tk)

    out = jax.ShapeDtypeStruct((M, N), out_dtype)
    return pl.pallas_call(
        _fused_qkv_kernel,
        out_shape=(out, out, out),
        grid=grid,
        in_specs=[
            pl.BlockSpec((tm, tk), lambda i, j, kk: (i, kk)),
            pl.BlockSpec((3, tk, tn), lambda i, j, kk: (0, kk, j)),
            pl.BlockSpec((3, 1, tn), lambda i, j, kk: (0, 0, j)),
        ],
        out_specs=(
            pl.BlockSpec((tm, tn), lambda i, j, kk: (i, j)),
            pl.BlockSpec((tm, tn), lambda i, j, kk: (i, j)),
            pl.BlockSpec((tm, tn), lambda i, j, kk: (i, j)),
        ),
        scratch_shapes=[
            pltpu.VMEM((tm, tn), jnp.float32),
            pltpu.VMEM((tm, tn), jnp.float32),
            pltpu.VMEM((tm, tn), jnp.float32),
        ],
        compiler_params=pltpu.CompilerParams(
            dimension_semantics=("parallel", "parallel", "arbitrary"),
            vmem_limit_bytes=_VMEM_LIMIT,
        ),
    )(x, w_stacked, b_stacked)


# ------------------------- flash-style attention kernel ------------------------------


def _flash_attn_kernel(q_ref, k_ref, v_ref, kvalid_ref, qvalid_ref, o_ref,
                       m_scr, l_scr, acc_scr, *, num_heads, head_dim):
    ki = pl.program_id(2)

    @pl.when(ki == 0)
    def _init():
        m_scr[...] = jnp.full_like(m_scr, _ROW_INIT)
        l_scr[...] = jnp.zeros_like(l_scr)
        acc_scr[...] = jnp.zeros_like(acc_scr)

    key_ok = kvalid_ref[...] > 0.5                                    # (1, tkv) bool

    for h in range(num_heads):
        sl = slice(h * head_dim, (h + 1) * head_dim)
        # scores: contract the head dims directly (no k.T / no transpose);
        # q is already scaled by 1/sqrt(Dh) via the projection weights.
        s = lax.dot_general(q_ref[:, sl], k_ref[:, sl],
                            dimension_numbers=(((1,), (1,)), ((), ())),
                            preferred_element_type=jnp.float32)       # (tq, tkv) f32
        s = jnp.where(key_ok, s, _NEG_BIG)                            # mask padded keys

        m_prev = m_scr[h]                                             # (tq, 1)
        l_prev = l_scr[h]
        m_new = jnp.maximum(m_prev, jnp.max(s, axis=-1, keepdims=True))
        alpha = jnp.exp(m_prev - m_new)
        p = jnp.exp(s - m_new)                                        # (tq, tkv) f32
        m_scr[h] = m_new
        l_scr[h] = alpha * l_prev + jnp.sum(p, axis=-1, keepdims=True)

        pv = lax.dot_general(p.astype(v_ref.dtype), v_ref[:, sl],
                             dimension_numbers=(((1,), (0,)), ((), ())),
                             preferred_element_type=jnp.float32)      # (tq, Dh) f32
        acc_scr[:, sl] = alpha * acc_scr[:, sl] + pv

    @pl.when(ki == pl.num_programs(2) - 1)
    def _finalize():
        # Normalize each head and fold in the query-padding mask in one (tq,1)
        # scale per head: padded QUERY rows become exact zeros (flash_attn
        # pads output rows with 0).
        qvalid = qvalid_ref[...]                                      # (tq, 1) f32
        for h in range(num_heads):
            sl = slice(h * head_dim, (h + 1) * head_dim)
            inv = pl.reciprocal(l_scr[h], approx=True) * qvalid       # (tq, 1)
            acc_scr[:, sl] = acc_scr[:, sl] * inv
        # single lane-dense store of the full (tq, H*Dh) tile.
        o_ref[...] = acc_scr[...].astype(o_ref.dtype)


def pallas_flash_attention(q, k, v, key_valid, query_valid, num_heads,
                           *, tq_pref=256, tkv_pref=512):
    """q, k, v: (B, S, H*Dh) (bf16); key_valid: (B, 1, S) f32; query_valid: (B, S, 1) f32.
    Returns context (B, S, H*Dh) f32 in the merged-head layout."""
    B, S, Hd = q.shape
    head_dim = Hd // num_heads
    tq = _tile(S, tq_pref, 8)
    tkv = _tile(S, tkv_pref, 128)
    grid = (B, S // tq, S // tkv)

    kernel = functools.partial(_flash_attn_kernel,
                               num_heads=num_heads, head_dim=head_dim)

    return pl.pallas_call(
        kernel,
        out_shape=jax.ShapeDtypeStruct((B, S, Hd), jnp.float32),
        grid=grid,
        in_specs=[
            pl.BlockSpec((None, tq, Hd), lambda b, qi, ki: (b, qi, 0)),    # q
            pl.BlockSpec((None, tkv, Hd), lambda b, qi, ki: (b, ki, 0)),   # k
            pl.BlockSpec((None, tkv, Hd), lambda b, qi, ki: (b, ki, 0)),   # v
            pl.BlockSpec((None, 1, tkv), lambda b, qi, ki: (b, 0, ki)),    # key validity
            pl.BlockSpec((None, tq, 1), lambda b, qi, ki: (b, qi, 0)),     # query validity
        ],
        out_specs=pl.BlockSpec((None, tq, Hd), lambda b, qi, ki: (b, qi, 0)),
        scratch_shapes=[
            pltpu.VMEM((num_heads, tq, 1), jnp.float32),   # running row max (per head)
            pltpu.VMEM((num_heads, tq, 1), jnp.float32),   # running denominator (per head)
            pltpu.VMEM((tq, Hd), jnp.float32),             # output accumulator
        ],
        compiler_params=pltpu.CompilerParams(
            dimension_semantics=("parallel", "parallel", "arbitrary"),
            vmem_limit_bytes=_VMEM_LIMIT,
        ),
    )(q, k, v, key_valid, query_valid)


# ------------------------- module wrapper --------------------------------------------


def make_params(key, hidden_size, initializer_range=0.02):
    """Deterministic init matching the module: Linear weights ~ N(0, init_range), bias = 0."""
    kq, kk, kv = jax.random.split(key, 3)

    def lin(k):
        w = jax.random.normal(k, (hidden_size, hidden_size), jnp.float32) * initializer_range
        b = jnp.zeros((1, hidden_size), jnp.float32)
        return w, b

    wq, bq = lin(kq)
    wk, bk = lin(kk)
    wv, bv = lin(kv)
    return dict(wq=wq, bq=bq, wk=wk, bk=bk, wv=wv, bv=bv)


def esm_self_attention_forward(hidden_states, attention_mask, params, num_heads):
    """Mirrors EsmSelfAttentionAddFlashAttnPatch.forward (absolute position embeddings,
    is_decoder=False, FlashAttention dropout=0). Returns a 1-tuple (context_layer,)."""
    # TODO(synk): 'rotary' / 'relative_key*' position_embedding_type branches are not
    # implemented (module default 'absolute' is what this reproduces).
    B, S, Hd = hidden_states.shape
    head_dim = Hd // num_heads
    scale = 1.0 / math.sqrt(head_dim)

    # ---- fused QKV projection: x read from HBM once for all three matmuls. ----
    # PyTorch Linear is y = x @ W.T + b; the 1/sqrt(Dh) attention scale is folded into
    # the query weights/bias so the attention kernel does no explicit score scaling.
    w_stacked = jnp.stack(
        [params["wq"].T * scale, params["wk"].T, params["wv"].T]
    ).astype(jnp.bfloat16)                                        # (3, Hd, Hd)
    b_stacked = jnp.stack(
        [params["bq"] * scale, params["bk"], params["bv"]]
    ).astype(jnp.float32)                                         # (3, 1, Hd)

    x2d = hidden_states.reshape(B * S, Hd).astype(jnp.bfloat16)
    q2d, k2d, v2d = fused_qkv_projection(x2d, w_stacked, b_stacked)

    # Stay in the (B, S, H*Dh) layout: the head split/merge happens inside the attention
    # kernel via static lane slices -> no XLA transposes, lane-dense output stores.
    q = q2d.reshape(B, S, Hd)
    k = k2d.reshape(B, S, Hd)
    v = v2d.reshape(B, S, Hd)

    # new_attention_mask = (squeeze(attention_mask) == 0): 1.0 = real token, 0.0 = padding.
    # reshape (not squeeze) so B == 1 / S == 1 edge cases stay well-formed.
    if attention_mask is None:
        valid = jnp.ones((B, S), jnp.float32)
    else:
        valid = (attention_mask.reshape(B, S) == 0).astype(jnp.float32)
    key_valid = valid.reshape(B, 1, S)
    query_valid = valid.reshape(B, S, 1)

    ctx = pallas_flash_attention(q, k, v, key_valid, query_valid, num_heads)  # (B, S, Hd)
    return (ctx,)


# ------------------------- reference (plain JAX, f32) ---------------------------------


def reference_forward(hidden_states, attention_mask, params, num_heads):
    B, S, Hd = hidden_states.shape
    Dh = Hd // num_heads
    x2d = hidden_states.reshape(B * S, Hd)
    q = x2d @ params["wq"].T + params["bq"]
    k = x2d @ params["wk"].T + params["bk"]
    v = x2d @ params["wv"].T + params["bv"]
    sh = lambda t: t.reshape(B, S, num_heads, Dh).transpose(0, 2, 1, 3)
    q, k, v = sh(q), sh(k), sh(v)
    valid = (attention_mask.reshape(B, S) == 0).astype(jnp.float32)
    s = jnp.einsum("bhqd,bhkd->bhqk", q, k) / np.sqrt(Dh)
    s = jnp.where(valid[:, None, None, :] > 0, s, _NEG_BIG)
    p = jax.nn.softmax(s, axis=-1)
    o = jnp.einsum("bhqk,bhkd->bhqd", p, v)
    o = o * valid[:, None, :, None]
    return o.transpose(0, 2, 1, 3).reshape(B, S, Hd)


# ------------------------- main --------------------------------------------------------


if __name__ == "__main__":
    # --- config 1: small shapes from the module spec --------------------------------
    B, S, HIDDEN, HEADS = 2, 8, 32, 4
    key = jax.random.PRNGKey(0)
    k_params, k_x = jax.random.split(key)
    params = make_params(k_params, HIDDEN, initializer_range=0.02)
    hidden_states = jax.random.normal(k_x, (B, S, HIDDEN), jnp.float32)

    # HF-style extended additive attention mask: 0 for valid, -1e9 for padding.
    # batch 0: all valid; batch 1: last 2 tokens padded.
    pad = jnp.array([[0] * S, [0] * (S - 2) + [1, 1]], dtype=jnp.float32)   # (B, S)
    attention_mask = (pad * -1e9).reshape(B, 1, 1, S)

    out = esm_self_attention_forward(hidden_states, attention_mask, params, HEADS)
    ctx = jax.block_until_ready(out[0])

    ref = reference_forward(hidden_states, attention_mask, params, HEADS)
    np.testing.assert_allclose(np.asarray(ctx), np.asarray(ref), rtol=5e-2, atol=5e-3)
    # padded query rows must be exactly zero (flash_attn semantics)
    np.testing.assert_array_equal(np.asarray(ctx[1, S - 2:]), 0.0)

    # --- config 2: larger shapes exercising multi-tile / multi-kv-step paths --------
    B2, S2, H2, HEADS2 = 1, 1024, 64, 2
    k2p, k2x = jax.random.split(jax.random.PRNGKey(1))
    params2 = make_params(k2p, H2, initializer_range=0.02)
    hs2 = jax.random.normal(k2x, (B2, S2, H2), jnp.float32)
    pad2 = jnp.concatenate(
        [jnp.zeros((B2, S2 - 100), jnp.float32), jnp.ones((B2, 100), jnp.float32)], axis=1)
    mask2 = (pad2 * -1e9).reshape(B2, 1, 1, S2)

    out2 = esm_self_attention_forward(hs2, mask2, params2, HEADS2)
    ctx2 = jax.block_until_ready(out2[0])
    ref2 = reference_forward(hs2, mask2, params2, HEADS2)
    np.testing.assert_allclose(np.asarray(ctx2), np.asarray(ref2), rtol=5e-2, atol=1e-3)
    np.testing.assert_array_equal(np.asarray(ctx2[0, S2 - 100:]), 0.0)

    print("KERNEL_OK")
</pallas_src>

<mosaic_0001>
module attributes {stable_mosaic.version = 11 : i64} {
  func.func @_fused_qkv_kernel(%arg0: i32, %arg1: i32, %arg2: i32, %arg3: memref<16x32xbf16, #tpu.memory_space<vmem>>, %arg4: memref<3x32x32xbf16, #tpu.memory_space<vmem>>, %arg5: memref<3x1x32xf32, #tpu.memory_space<vmem>>, %arg6: memref<16x32xbf16, #tpu.memory_space<vmem>>, %arg7: memref<16x32xbf16, #tpu.memory_space<vmem>>, %arg8: memref<16x32xbf16, #tpu.memory_space<vmem>>, %arg9: memref<16x32xf32, #tpu.memory_space<vmem>>, %arg10: memref<16x32xf32, #tpu.memory_space<vmem>>, %arg11: memref<16x32xf32, #tpu.memory_space<vmem>>) attributes {dimension_semantics = [#tpu.dimension_semantics<parallel>, #tpu.dimension_semantics<parallel>, #tpu.dimension_semantics<arbitrary>], iteration_bounds = array<i64: 1, 1, 1>, scalar_prefetch = 0 : i64, scratch_operands = 3 : i64, tpu.core_type = #tpu.core_type<tc>, window_params = [{transform_indices = @transform_0, window_bounds = array<i64: 16, 32>}, {transform_indices = @transform_1, window_bounds = array<i64: 3, 32, 32>}, {transform_indices = @transform_2, window_bounds = array<i64: 3, 1, 32>}, {transform_indices = @transform_3, window_bounds = array<i64: 16, 32>}, {transform_indices = @transform_4, window_bounds = array<i64: 16, 32>}, {transform_indices = @transform_5, window_bounds = array<i64: 16, 32>}]} {
    %c0_i32 = arith.constant 0 : i32
    %0 = arith.cmpi eq, %arg2, %c0_i32 : i32
    %1 = arith.extui %0 : i1 to i32
    %c0_i32_0 = arith.constant 0 : i32
    %2 = arith.cmpi ne, %1, %c0_i32_0 : i32
    scf.if %2 {
      %cst_25 = arith.constant 0.000000e+00 : f32
      %25 = vector.broadcast %cst_25 : f32 to vector<16x32xf32>
      %c0_26 = arith.constant 0 : index
      %c0_27 = arith.constant 0 : index
      %26 = vector.load %arg9[%c0_26, %c0_27] : memref<16x32xf32, #tpu.memory_space<vmem>>, vector<16x32xf32>
      tpu.vector_store %arg9[%c0_26, %c0_27], %25 {strides = array<i32>} : memref<16x32xf32, #tpu.memory_space<vmem>>, vector<16x32xf32>,
      %cst_28 = arith.constant 0.000000e+00 : f32
      %27 = vector.broadcast %cst_28 : f32 to vector<16x32xf32>
      %c0_29 = arith.constant 0 : index
      %c0_30 = arith.constant 0 : index
      %28 = vector.load %arg10[%c0_29, %c0_30] : memref<16x32xf32, #tpu.memory_space<vmem>>, vector<16x32xf32>
      tpu.vector_store %arg10[%c0_29, %c0_30], %27 {strides = array<i32>} : memref<16x32xf32, #tpu.memory_space<vmem>>, vector<16x32xf32>,
      %cst_31 = arith.constant 0.000000e+00 : f32
      %29 = vector.broadcast %cst_31 : f32 to vector<16x32xf32>
      %c0_32 = arith.constant 0 : index
      %c0_33 = arith.constant 0 : index
      %30 = vector.load %arg11[%c0_32, %c0_33] : memref<16x32xf32, #tpu.memory_space<vmem>>, vector<16x32xf32>
      tpu.vector_store %arg11[%c0_32, %c0_33], %29 {strides = array<i32>} : memref<16x32xf32, #tpu.memory_space<vmem>>, vector<16x32xf32>,
    } else {
    }
    %c0 = arith.constant 0 : index
    %c0_1 = arith.constant 0 : index
    %3 = vector.load %arg3[%c0, %c0_1] : memref<16x32xbf16, #tpu.memory_space<vmem>>, vector<16x32xbf16>
    %c0_2 = arith.constant 0 : index
    %c0_3 = arith.constant 0 : index
    %4 = vector.load %arg9[%c0_2, %c0_3] : memref<16x32xf32, #tpu.memory_space<vmem>>, vector<16x32xf32>
    %c0_4 = arith.constant 0 : index
    %c0_5 = arith.constant 0 : index
    %c0_6 = arith.constant 0 : index
    %5 = vector.load %arg4[%c0_4, %c0_5, %c0_6] : memref<3x32x32xbf16, #tpu.memory_space<vmem>>, vector<1x32x32xbf16>
    %6 = vector.shape_cast %5 : vector<1x32x32xbf16> to vector<32x32xbf16>
    %cst = arith.constant dense<0.000000e+00> : vector<16x32xf32>
    %7 = tpu.matmul %3, %6, %cst {dimension_numbers = #tpu.dot_dimension_numbers<[1], [0], [0], [1], [0, 0, 1, 1], [], []>} : vector<16x32xbf16>, vector<32x32xbf16>, vector<16x32xf32> -> vector<16x32xf32>
    %8 = arith.addf %4, %7 : vector<16x32xf32>
    %c0_7 = arith.constant 0 : index
    %c0_8 = arith.constant 0 : index
    %9 = vector.load %arg9[%c0_7, %c0_8] : memref<16x32xf32, #tpu.memory_space<vmem>>, vector<16x32xf32>
    tpu.vector_store %arg9[%c0_7, %c0_8], %8 {strides = array<i32>} : memref<16x32xf32, #tpu.memory_space<vmem>>, vector<16x32xf32>,
    %c0_9 = arith.constant 0 : index
    %c0_10 = arith.constant 0 : index
    %10 = vector.load %arg10[%c0_9, %c0_10] : memref<16x32xf32, #tpu.memory_space<vmem>>, vector<16x32xf32>
    %c1 = arith.constant 1 : index
    %c0_11 = arith.constant 0 : index
    %c0_12 = arith.constant 0 : index
    %11 = vector.load %arg4[%c1, %c0_11, %c0_12] : memref<3x32x32xbf16, #tpu.memory_space<vmem>>, vector<1x32x32xbf16>
    %12 = vector.shape_cast %11 : vector<1x32x32xbf16> to vector<32x32xbf16>
    %cst_13 = arith.constant dense<0.000000e+00> : vector<16x32xf32>
    %13 = tpu.matmul %3, %12, %cst_13 {dimension_numbers = #tpu.dot_dimension_numbers<[1], [0], [0], [1], [0, 0, 1, 1], [], []>} : vector<16x32xbf16>, vector<32x32xbf16>, vector<16x32xf32> -> vector<16x32xf32>
    %14 = arith.addf %10, %13 : vector<16x32xf32>
    %c0_14 = arith.constant 0 : index
    %c0_15 = arith.constant 0 : index
    %15 = vector.load %arg10[%c0_14, %c0_15] : memref<16x32xf32, #tpu.memory_space<vmem>>, vector<16x32xf32>
    tpu.vector_store %arg10[%c0_14, %c0_15], %14 {strides = array<i32>} : memref<16x32xf32, #tpu.memory_space<vmem>>, vector<16x32xf32>,
    %c0_16 = arith.constant 0 : index
    %c0_17 = arith.constant 0 : index
    %16 = vector.load %arg11[%c0_16, %c0_17] : memref<16x32xf32, #tpu.memory_space<vmem>>, vector<16x32xf32>
    %c2 = arith.constant 2 : index
    %c0_18 = arith.constant 0 : index
    %c0_19 = arith.constant 0 : index
    %17 = vector.load %arg4[%c2, %c0_18, %c0_19] : memref<3x32x32xbf16, #tpu.memory_space<vmem>>, vector<1x32x32xbf16>
    %18 = vector.shape_cast %17 : vector<1x32x32xbf16> to vector<32x32xbf16>
    %cst_20 = arith.constant dense<0.000000e+00> : vector<16x32xf32>
    %19 = tpu.matmul %3, %18, %cst_20 {dimension_numbers = #tpu.dot_dimension_numbers<[1], [0], [0], [1], [0, 0, 1, 1], [], []>} : vector<16x32xbf16>, vector<32x32xbf16>, vector<16x32xf32> -> vector<16x32xf32>
    %20 = arith.addf %16, %19 : vector<16x32xf32>
    %c0_21 = arith.constant 0 : index
    %c0_22 = arith.constant 0 : index
    %21 = vector.load %arg11[%c0_21, %c0_22] : memref<16x32xf32, #tpu.memory_space<vmem>>, vector<16x32xf32>
    tpu.vector_store %arg11[%c0_21, %c0_22], %20 {strides = array<i32>} : memref<16x32xf32, #tpu.memory_space<vmem>>, vector<16x32xf32>,
    %c0_i32_23 = arith.constant 0 : i32
    %22 = arith.cmpi eq, %arg2, %c0_i32_23 : i32
    %23 = arith.extui %22 : i1 to i32
    %c0_i32_24 = arith.constant 0 : i32
    %24 = arith.cmpi ne, %23, %c0_i32_24 : i32
    scf.if %24 {
      %c0_25 = arith.constant 0 : index
      %c0_26 = arith.constant 0 : index
      %25 = vector.load %arg9[%c0_25, %c0_26] : memref<16x32xf32, #tpu.memory_space<vmem>>, vector<16x32xf32>
      %c0_27 = arith.constant 0 : index
      %c0_28 = arith.constant 0 : index
      %c0_29 = arith.constant 0 : index
      %26 = vector.load %arg5[%c0_27, %c0_28, %c0_29] : memref<3x1x32xf32, #tpu.memory_space<vmem>>, vector<1x1x32xf32>
      %27 = vector.shape_cast %26 : vector<1x1x32xf32> to vector<1x32xf32>
      %28 = vector.broadcast %27 : vector<1x32xf32> to vector<16x32xf32>
      %29 = arith.addf %25, %28 : vector<16x32xf32>
      %30 = arith.truncf %29 : vector<16x32xf32> to vector<16x32xbf16>
      %c0_30 = arith.constant 0 : index
      %c0_31 = arith.constant 0 : index
      %31 = vector.load %arg6[%c0_30, %c0_31] : memref<16x32xbf16, #tpu.memory_space<vmem>>, vector<16x32xbf16>
      tpu.vector_store %arg6[%c0_30, %c0_31], %30 {strides = array<i32>} : memref<16x32xbf16, #tpu.memory_space<vmem>>, vector<16x32xbf16>,
      %c0_32 = arith.constant 0 : index
      %c0_33 = arith.constant 0 : index
      %32 = vector.load %arg10[%c0_32, %c0_33] : memref<16x32xf32, #tpu.memory_space<vmem>>, vector<16x32xf32>
      %c1_34 = arith.constant 1 : index
      %c0_35 = arith.constant 0 : index
      %c0_36 = arith.constant 0 : index
      %33 = vector.load %arg5[%c1_34, %c0_35, %c0_36] : memref<3x1x32xf32, #tpu.memory_space<vmem>>, vector<1x1x32xf32>
      %34 = vector.shape_cast %33 : vector<1x1x32xf32> to vector<1x32xf32>
      %35 = vector.broadcast %34 : vector<1x32xf32> to vector<16x32xf32>
      %36 = arith.addf %32, %35 : vector<16x32xf32>
      %37 = arith.truncf %36 : vector<16x32xf32> to vector<16x32xbf16>
      %c0_37 = arith.constant 0 : index
      %c0_38 = arith.constant 0 : index
      %38 = vector.load %arg7[%c0_37, %c0_38] : memref<16x32xbf16, #tpu.memory_space<vmem>>, vector<16x32xbf16>
      tpu.vector_store %arg7[%c0_37, %c0_38], %37 {strides = array<i32>} : memref<16x32xbf16, #tpu.memory_space<vmem>>, vector<16x32xbf16>,
      %c0_39 = arith.constant 0 : index
      %c0_40 = arith.constant 0 : index
      %39 = vector.load %arg11[%c0_39, %c0_40] : memref<16x32xf32, #tpu.memory_space<vmem>>, vector<16x32xf32>
      %c2_41 = arith.constant 2 : index
      %c0_42 = arith.constant 0 : index
      %c0_43 = arith.constant 0 : index
      %40 = vector.load %arg5[%c2_41, %c0_42, %c0_43] : memref<3x1x32xf32, #tpu.memory_space<vmem>>, vector<1x1x32xf32>
      %41 = vector.shape_cast %40 : vector<1x1x32xf32> to vector<1x32xf32>
      %42 = vector.broadcast %41 : vector<1x32xf32> to vector<16x32xf32>
      %43 = arith.addf %39, %42 : vector<16x32xf32>
      %44 = arith.truncf %43 : vector<16x32xf32> to vector<16x32xbf16>
      %c0_44 = arith.constant 0 : index
      %c0_45 = arith.constant 0 : index
      %45 = vector.load %arg8[%c0_44, %c0_45] : memref<16x32xbf16, #tpu.memory_space<vmem>>, vector<16x32xbf16>
      tpu.vector_store %arg8[%c0_44, %c0_45], %44 {strides = array<i32>} : memref<16x32xbf16, #tpu.memory_space<vmem>>, vector<16x32xbf16>,
    } else {
    }
    return
  }
  func.func @transform_0(%arg0: i32, %arg1: i32, %arg2: i32) -> (i32, i32) {
    %c0_i32 = arith.constant 0 : i32
    return %arg0, %arg2 : i32, i32
  }
  func.func @transform_1(%arg0: i32, %arg1: i32, %arg2: i32) -> (i32, i32, i32) {
    %c0_i32 = arith.constant 0 : i32
    %c0_i32_0 = arith.constant 0 : i32
    return %c0_i32, %arg2, %arg1 : i32, i32, i32
  }
  func.func @transform_2(%arg0: i32, %arg1: i32, %arg2: i32) -> (i32, i32, i32) {
    %c0_i32 = arith.constant 0 : i32
    %c0_i32_0 = arith.constant 0 : i32
    %c0_i32_1 = arith.constant 0 : i32
    return %c0_i32, %c0_i32_0, %arg1 : i32, i32, i32
  }
  func.func @transform_3(%arg0: i32, %arg1: i32, %arg2: i32) -> (i32, i32) {
    %c0_i32 = arith.constant 0 : i32
    return %arg0, %arg1 : i32, i32
  }
  func.func @transform_4(%arg0: i32, %arg1: i32, %arg2: i32) -> (i32, i32) {
    %c0_i32 = arith.constant 0 : i32
    return %arg0, %arg1 : i32, i32
  }
  func.func @transform_5(%arg0: i32, %arg1: i32, %arg2: i32) -> (i32, i32) {
    %c0_i32 = arith.constant 0 : i32
    return %arg0, %arg1 : i32, i32
  }
}

</mosaic_0001>

<llo_original>
// kernel: tpu_custom_call.1
$region0: #{tpu_custom_call.1}
  #allocation0 [shape = 'u32[]', space=smem, size = 0x4, offset = 0x4, fixed_abs, tag = 'smem constant byte address 0x4 - core index']
  #allocation1 [shape = 'u32[144,128]{1,0:T(1,128)}', space=vmem, size = 0x12000, scoped, tag = 'internal scratch']
  #allocation2 [shape = 'f32[16,32]{1,0:T(8,128)}', space=vmem, size = 0x2000, scoped, tag = 'scratch operand']
  #allocation3 [shape = 'f32[16,32]{1,0:T(8,128)}', space=vmem, size = 0x2000, scoped, tag = 'scratch operand']
  #allocation4 [shape = 'f32[16,32]{1,0:T(8,128)}', space=vmem, size = 0x2000, scoped, tag = 'scratch operand']
  %s0 = inlined_call_operand.hbm [shape: bf16[16,32], index: 0, kind: input, shape index: {}]
  %s1 = inlined_call_operand.hbm [shape: bf16[3,32,32], index: 1, kind: input, shape index: {}]
  %s2 = inlined_call_operand.vmem [shape: f32[3,1,32], index: 2, kind: input, shape index: {}]
  %s3 = inlined_call_operand.hbm [shape: bf16[16,32], index: 3, kind: output, shape index: {0}]
  %s4 = inlined_call_operand.hbm [shape: bf16[16,32], index: 4, kind: output, shape index: {1}]
  %s5 = inlined_call_operand.hbm [shape: bf16[16,32], index: 5, kind: output, shape index: {2}]
  %6 = xla_tuple %s3, %s4, %s5
  %s7 = sld [smem:[#allocation0]]
  $region54: #{tpu_custom_call.1} parent=0
    _
  %s9 = ssub.s32 1, %s7
  %s10 = scalar_select 0, %s9, %s7
  $region1: #{tpu_custom_call.1} parent=0
    #allocation5 [shape = 'u8[4096]{0}', space=vmem, size = 0x1000, scoped, tag = 'input window, operand 0, single buffered']
    #allocation6 [shape = 's32[1]{0}', space=sflag, size = 0x4, scoped, tag = 'scoped memory for tpu_custom_call.1']
    #allocation7 [shape = 's32[1]{0}', space=sflag, size = 0x4, scoped, tag = 'scoped memory for tpu_custom_call.1']
    #allocation8 [shape = 'u8[24576]{0}', space=vmem, size = 0x6000, scoped, tag = 'input window, operand 1, single buffered']
    #allocation9 [shape = 's32[1]{0}', space=sflag, size = 0x4, scoped, tag = 'scoped memory for tpu_custom_call.1']
    #allocation10 [shape = 'u8[4096]{0}', space=vmem, size = 0x1000, scoped, tag = 'output window, operand 0, single buffered']
    #allocation11 [shape = 'u8[4096]{0}', space=vmem, size = 0x1000, scoped, tag = 'output window, operand 1, single buffered']
    #allocation12 [shape = 's32[1]{0}', space=sflag, size = 0x4, scoped, tag = 'scoped memory for tpu_custom_call.1']
    #allocation13 [shape = 'u8[4096]{0}', space=vmem, size = 0x1000, scoped, tag = 'output window, operand 2, single buffered']
    %11 = vsyncpa [#allocation6], 0
    %12 = vsyncpa [#allocation9], 0
    %13 = vsyncpa [#allocation7], 0
    %14 = vsyncpa [#allocation12], 0
    // Predicated region
    $region2: #{tpu_custom_call.1} parent=1 // pred_check
      _
    $region3: #{tpu_custom_call.1} parent=1 // pred_check_branch
      %16 = sbr.rel (0) target = $region5
    $region4: #{tpu_custom_call.1} parent=1 // pred_region
      %s18 = ssub.s32 128, 128
      %19 = vsyncadd [#allocation6], %s18
      %s20 = sshll.u32 [#allocation5], 4
      %s21 = int_to_ptr.vmem [resolvable:$true] %s20
      %26 = dma.hbm_to_vmem [thread:$0]  %s0, 128, %s21, [#allocation6], 64, 64, 4
    $region5: #{tpu_custom_call.1} parent=1 // pred_fallthru
      _
    // Predicated region
    $region6: #{tpu_custom_call.1} parent=1 // pred_check
      _
    $region7: #{tpu_custom_call.1} parent=1 // pred_check_branch
      %28 = sbr.rel (0) target = $region9
    $region8: #{tpu_custom_call.1} parent=1 // pred_region
      %s30 = ssub.s32 768, 768
      %31 = vsyncadd [#allocation9], %s30
      %s32 = sshll.u32 [#allocation8], 4
      %s33 = int_to_ptr.vmem [resolvable:$true] %s32
      %38 = dma.hbm_to_vmem [thread:$0]  %s1, 768, %s33, [#allocation9], 64, 64, 4
    $region9: #{tpu_custom_call.1} parent=1 // pred_fallthru
      _
    // Predicated region
    $region10: #{tpu_custom_call.1} parent=1 // pred_check
      _
    $region11: #{tpu_custom_call.1} parent=1 // pred_check_branch
      %40 = sbr.rel (0) target = $region13
    $region12: #{tpu_custom_call.1} parent=1 // pred_region
      _
    $region13: #{tpu_custom_call.1} parent=1 // pred_fallthru
      _
    // Predicated region
    $region14: #{tpu_custom_call.1} parent=1 // pred_check
      _
    $region15: #{tpu_custom_call.1} parent=1 // pred_check_branch
      %42 = sbr.rel (0) target = $region17
    $region16: #{tpu_custom_call.1} parent=1 // pred_region
      %43 = dma.done [#allocation6], 128
    $region17: #{tpu_custom_call.1} parent=1 // pred_fallthru
      _
    // Predicated region
    $region18: #{tpu_custom_call.1} parent=1 // pred_check
      _
    $region19: #{tpu_custom_call.1} parent=1 // pred_check_branch
      %45 = sbr.rel (0) target = $region21
    $region20: #{tpu_custom_call.1} parent=1 // pred_region
      %46 = dma.done [#allocation9], 768
    $region21: #{tpu_custom_call.1} parent=1 // pred_fallthru
      _
    %p48 = scmp.eq.s32.totalorder 0, 0
    // Predicated region
    $region22: #{tpu_custom_call.1} parent=1 // pred_check
      %p49 = pneg %p48
    $region23: #{tpu_custom_call.1} parent=1 // pred_check_branch
      %51 = sbr.rel (%p49) target = $region25
    $region24: #{tpu_custom_call.1} parent=1 // pred_region
      %vm52 = vcmask 261120
      %53 = vst.msk [vmem:[#allocation2] sm:$0xff] %vm52, 0.0
      %54 = vst.msk [vmem:[#allocation2 + $0x8] sm:$0xff] %vm52, 0.0
      %55 = vst.msk [vmem:[#allocation3] sm:$0xff] %vm52, 0.0
      %56 = vst.msk [vmem:[#allocation3 + $0x8] sm:$0xff] %vm52, 0.0
      %57 = vst.msk [vmem:[#allocation4] sm:$0xff] %vm52, 0.0
      %58 = vst.msk [vmem:[#allocation4 + $0x8] sm:$0xff] %vm52, 0.0
    $region25: #{tpu_custom_call.1} parent=1 // pred_fallthru
      _
    %v59 = vld [vmem:[#allocation5] sm:$0xf]
    %v60 = vld [vmem:[#allocation5 + $0x4] sm:$0xf]
    %v61 = vld [vmem:[#allocation2] sm:$0xff]
    %v62 = vld [vmem:[#allocation2 + $0x8] sm:$0xff]
    %v63 = vld [vmem:[#allocation8] sm:$0xf]
    %v64 = vld [vmem:[#allocation8 + $0x4] sm:$0xf]
    %v65 = vld [vmem:[#allocation8 + $0x8] sm:$0xf]
    %v66 = vld [vmem:[#allocation8 + $0xc] sm:$0xf]
    %v69 = vunpack.c.l.b16 %v59
    %v70 = vunpack.c.l.b16 %v60
    %v71 = vpack.c.b16 %v70, %v69
    %v76 = vunpack.c.l.b16 %v63
    %v77 = vunpack.c.l.b16 %v64
    %v78 = vunpack.c.l.b16 %v65
    %v79 = vunpack.c.l.b16 %v66
    %v80 = vpack.c.b16 %v77, %v76
    %v81 = vpack.c.b16 %v79, %v78
    %vm84 = vcmask 261120
    %v86 = vsel %vm84, %v71, 0
    %88 = vmatprep.subr.bf16.mxu0 0
    %89 = vmatpush1.bf16.msra.mxu0 %v80
    %90 = vmatprep.subr.bf16.mxu0 0
    %91 = vmatpush1.bf16.msra.mxu0 %v81
    %92 = vmatprep.subr.bf16.mxu0 0
    %93 = vmatpush1.bf16.msra.mxu0 0
    %94 = vmatprep.subr.bf16.mxu0 0
    %95 = vmatpush1.bf16.msra.mxu0 0
    %96 = vmatprep.subr.bf16.mxu0 0
    %97 = vmatpush1.bf16.msra.mxu0 0
    %98 = vmatprep.subr.bf16.mxu0 0
    %99 = vmatpush1.bf16.msra.mxu0 0
    %100 = vmatprep.subr.bf16.mxu0 0
    %101 = vmatpush1.bf16.msra.mxu0 0
    %102 = vmatprep.subr.bf16.mxu0 0
    %103 = vmatpush1.bf16.msra.mxu0 0
    %104 = vmatprep.subr.bf16.mxu0 0
    %105 = vmatpush1.bf16.msra.mxu0 0
    %106 = vmatprep.subr.bf16.mxu0 0
    %107 = vmatpush1.bf16.msra.mxu0 0
    %108 = vmatprep.subr.bf16.mxu0 0
    %109 = vmatpush1.bf16.msra.mxu0 0
    %110 = vmatprep.subr.bf16.mxu0 0
    %111 = vmatpush1.bf16.msra.mxu0 0
    %112 = vmatprep.subr.bf16.mxu0 0
    %113 = vmatpush1.bf16.msra.mxu0 0
    %114 = vmatprep.subr.bf16.mxu0 0
    %115 = vmatpush1.bf16.msra.mxu0 0
    %116 = vmatprep.subr.bf16.mxu0 0
    %117 = vmatpush1.bf16.msra.mxu0 0
    %118 = vmatprep.subr.bf16.mxu0 0
    %119 = vmatpush1.bf16.msra.mxu0 0
    %120 = vmatprep.mubr.bf16.mxu0 0
    %121 = vmatmul.mubr.bf16.gmra.mrb[0].mxu0 %v86
    %v122 = vpop.f32.mrb[0].mxu0
    %v123 = vadd.f32 0.0, %v122
    %v124 = vpop.f32.mrb[0].mxu0
    %v125 = vpop.f32.mrb[0].mxu0
    %v126 = vadd.f32 0.0, %v125
    %v127 = vpop.f32.mrb[0].mxu0
    %128 = vdwg.mxu0
    %v129 = vadd.f32 %v61, %v123
    %v130 = vadd.f32 %v62, %v126
    %131 = vst.msk [vmem:[#allocation2] sm:$0xff] %vm84, %v129
    %132 = vst.msk [vmem:[#allocation2 + $0x8] sm:$0xff] %vm84, %v130
    %v133 = vld [vmem:[#allocation3] sm:$0xff]
    %v134 = vld [vmem:[#allocation3 + $0x8] sm:$0xff]
    %s135 = scalar_lea.vmem [#allocation8], 16
    %v136 = vld [vmem:[%s135] sm:$0xf]
    %v137 = vld [vmem:[%s135 + $0x4] sm:$0xf]
    %v138 = vld [vmem:[%s135 + $0x8] sm:$0xf]
    %v139 = vld [vmem:[%s135 + $0xc] sm:$0xf]
    %v144 = vunpack.c.l.b16 %v136
    %v145 = vunpack.c.l.b16 %v137
    %v146 = vunpack.c.l.b16 %v138
    %v147 = vunpack.c.l.b16 %v139
    %v148 = vpack.c.b16 %v145, %v144
    %v149 = vpack.c.b16 %v147, %v146
    %152 = vmatprep.subr.bf16.mxu0 0
    %153 = vmatpush1.bf16.msra.mxu0 %v148
    %154 = vmatprep.subr.bf16.mxu0 0
    %155 = vmatpush1.bf16.msra.mxu0 %v149
    %156 = vmatprep.subr.bf16.mxu0 0
    %157 = vmatpush1.bf16.msra.mxu0 0
    %158 = vmatprep.subr.bf16.mxu0 0
    %159 = vmatpush1.bf16.msra.mxu0 0
    %160 = vmatprep.subr.bf16.mxu0 0
    %161 = vmatpush1.bf16.msra.mxu0 0
    %162 = vmatprep.subr.bf16.mxu0 0
    %163 = vmatpush1.bf16.msra.mxu0 0
    %164 = vmatprep.subr.bf16.mxu0 0
    %165 = vmatpush1.bf16.msra.mxu0 0
    %166 = vmatprep.subr.bf16.mxu0 0
    %167 = vmatpush1.bf16.msra.mxu0 0
    %168 = vmatprep.subr.bf16.mxu0 0
    %169 = vmatpush1.bf16.msra.mxu0 0
    %170 = vmatprep.subr.bf16.mxu0 0
    %171 = vmatpush1.bf16.msra.mxu0 0
    %172 = vmatprep.subr.bf16.mxu0 0
    %173 = vmatpush1.bf16.msra.mxu0 0
    %174 = vmatprep.subr.bf16.mxu0 0
    %175 = vmatpush1.bf16.msra.mxu0 0
    %176 = vmatprep.subr.bf16.mxu0 0
    %177 = vmatpush1.bf16.msra.mxu0 0
    %178 = vmatprep.subr.bf16.mxu0 0
    %179 = vmatpush1.bf16.msra.mxu0 0
    %180 = vmatprep.subr.bf16.mxu0 0
    %181 = vmatpush1.bf16.msra.mxu0 0
    %182 = vmatprep.subr.bf16.mxu0 0
    %183 = vmatpush1.bf16.msra.mxu0 0
    %184 = vmatprep.mubr.bf16.mxu0 0
    %185 = vmatmul.mubr.bf16.gmra.mrb[0].mxu0 %v86
    %v186 = vpop.f32.mrb[0].mxu0
    %v187 = vadd.f32 0.0, %v186
    %v188 = vpop.f32.mrb[0].mxu0
    %v189 = vpop.f32.mrb[0].mxu0
    %v190 = vadd.f32 0.0, %v189
    %v191 = vpop.f32.mrb[0].mxu0
    %192 = vdwg.mxu0
    %v193 = vadd.f32 %v133, %v187
    %v194 = vadd.f32 %v134, %v190
    %195 = vst.msk [vmem:[#allocation3] sm:$0xff] %vm84, %v193
    %196 = vst.msk [vmem:[#allocation3 + $0x8] sm:$0xff] %vm84, %v194
    %v197 = vld [vmem:[#allocation4] sm:$0xff]
    %v198 = vld [vmem:[#allocation4 + $0x8] sm:$0xff]
    %s199 = scalar_lea.vmem [#allocation8], 32
    %v200 = vld [vmem:[%s199] sm:$0xf]
    %v201 = vld [vmem:[%s199 + $0x4] sm:$0xf]
    %v202 = vld [vmem:[%s199 + $0x8] sm:$0xf]
    %v203 = vld [vmem:[%s199 + $0xc] sm:$0xf]
    %v208 = vunpack.c.l.b16 %v200
    %v209 = vunpack.c.l.b16 %v201
    %v210 = vunpack.c.l.b16 %v202
    %v211 = vunpack.c.l.b16 %v203
    %v212 = vpack.c.b16 %v209, %v208
    %v213 = vpack.c.b16 %v211, %v210
    %216 = vmatprep.subr.bf16.mxu0 0
    %217 = vmatpush1.bf16.msra.mxu0 %v212
    %218 = vmatprep.subr.bf16.mxu0 0
    %219 = vmatpush1.bf16.msra.mxu0 %v213
    %220 = vmatprep.subr.bf16.mxu0 0
    %221 = vmatpush1.bf16.msra.mxu0 0
    %222 = vmatprep.subr.bf16.mxu0 0
    %223 = vmatpush1.bf16.msra.mxu0 0
    %224 = vmatprep.subr.bf16.mxu0 0
    %225 = vmatpush1.bf16.msra.mxu0 0
    %226 = vmatprep.subr.bf16.mxu0 0
    %227 = vmatpush1.bf16.msra.mxu0 0
    %228 = vmatprep.subr.bf16.mxu0 0
    %229 = vmatpush1.bf16.msra.mxu0 0
    %230 = vmatprep.subr.bf16.mxu0 0
    %231 = vmatpush1.bf16.msra.mxu0 0
    %232 = vmatprep.subr.bf16.mxu0 0
    %233 = vmatpush1.bf16.msra.mxu0 0
    %234 = vmatprep.subr.bf16.mxu0 0
    %235 = vmatpush1.bf16.msra.mxu0 0
    %236 = vmatprep.subr.bf16.mxu0 0
    %237 = vmatpush1.bf16.msra.mxu0 0
    %238 = vmatprep.subr.bf16.mxu0 0
    %239 = vmatpush1.bf16.msra.mxu0 0
    %240 = vmatprep.subr.bf16.mxu0 0
    %241 = vmatpush1.bf16.msra.mxu0 0
    %242 = vmatprep.subr.bf16.mxu0 0
    %243 = vmatpush1.bf16.msra.mxu0 0
    %244 = vmatprep.subr.bf16.mxu0 0
    %245 = vmatpush1.bf16.msra.mxu0 0
    %246 = vmatprep.subr.bf16.mxu0 0
    %247 = vmatpush1.bf16.msra.mxu0 0
    %248 = vmatprep.mubr.bf16.mxu0 0
    %249 = vmatmul.mubr.bf16.gmra.mrb[0].mxu0 %v86
    %v250 = vpop.f32.mrb[0].mxu0
    %v251 = vadd.f32 0.0, %v250
    %v252 = vpop.f32.mrb[0].mxu0
    %v253 = vpop.f32.mrb[0].mxu0
    %v254 = vadd.f32 0.0, %v253
    %v255 = vpop.f32.mrb[0].mxu0
    %256 = vdwg.mxu0
    %v257 = vadd.f32 %v197, %v251
    %v258 = vadd.f32 %v198, %v254
    %259 = vst.msk [vmem:[#allocation4] sm:$0xff] %vm84, %v257
    %260 = vst.msk [vmem:[#allocation4 + $0x8] sm:$0xff] %vm84, %v258
    // Predicated region
    $region26: #{tpu_custom_call.1} parent=1 // pred_check
      %p261 = pneg %p48
    $region27: #{tpu_custom_call.1} parent=1 // pred_check_branch
      %263 = sbr.rel (%p261) target = $region29
    $region28: #{tpu_custom_call.1} parent=1 // pred_region
      %v264 = vld [vmem:[#allocation2] sm:$0xff]
      %v265 = vld [vmem:[#allocation2 + $0x8] sm:$0xff]
      %v266 = vld [vmem:[%s2] sm:$0x1]
      %v268 = vlaneseq
      %v269 = vshrl.u32 %v268, 7
      %v270 = vsub.s32 0, %v269
      %v271 = vrot.slane %v266, %v270
      %v273 = vadd.f32 %v264, %v271
      %v274 = vadd.f32 %v265, %v271
      %v275 = vpack.c.bf16 %v274, %v273
      %v277 = vunpack.c.l.b16 %v275
      %v278 = vunpack.c.h.b16 %v275
      %v279 = vpack.c.b16 %v277, %v277
      %v280 = vpack.c.b16 %v278, %v278
      %vm283 = vcmask 257024
      %284 = vst.msk [vmem:[#allocation10] sm:$0xf] %vm283, %v279
      %285 = vst.msk [vmem:[#allocation10 + $0x4] sm:$0xf] %vm283, %v280
      %v286 = vld [vmem:[#allocation3] sm:$0xff]
      %v287 = vld [vmem:[#allocation3 + $0x8] sm:$0xff]
      %s288 = scalar_lea.vmem %s2, 1
      %v289 = vld [vmem:[%s288] sm:$0x1]
      %v291 = vlaneseq
      %v292 = vshrl.u32 %v291, 7
      %v293 = vsub.s32 0, %v292
      %v294 = vrot.slane %v289, %v293
      %v296 = vadd.f32 %v286, %v294
      %v297 = vadd.f32 %v287, %v294
      %v298 = vpack.c.bf16 %v297, %v296
      %v300 = vunpack.c.l.b16 %v298
      %v301 = vunpack.c.h.b16 %v298
      %v302 = vpack.c.b16 %v300, %v300
      %v303 = vpack.c.b16 %v301, %v301
      %306 = vst.msk [vmem:[#allocation11] sm:$0xf] %vm283, %v302
      %307 = vst.msk [vmem:[#allocation11 + $0x4] sm:$0xf] %vm283, %v303
      %v308 = vld [vmem:[#allocation4] sm:$0xff]
      %v309 = vld [vmem:[#allocation4 + $0x8] sm:$0xff]
      %s310 = scalar_lea.vmem %s2, 2
      %v311 = vld [vmem:[%s310] sm:$0x1]
      %v313 = vlaneseq
      %v314 = vshrl.u32 %v313, 7
      %v315 = vsub.s32 0, %v314
      %v316 = vrot.slane %v311, %v315
      %v318 = vadd.f32 %v308, %v316
      %v319 = vadd.f32 %v309, %v316
      %v320 = vpack.c.bf16 %v319, %v318
      %v322 = vunpack.c.l.b16 %v320
      %v323 = vunpack.c.h.b16 %v320
      %v324 = vpack.c.b16 %v322, %v322
      %v325 = vpack.c.b16 %v323, %v323
      %328 = vst.msk [vmem:[#allocation13] sm:$0xf] %vm283, %v324
      %329 = vst.msk [vmem:[#allocation13 + $0x4] sm:$0xf] %vm283, %v325
    $region29: #{tpu_custom_call.1} parent=1 // pred_fallthru
      _
    // Predicated region
    $region30: #{tpu_custom_call.1} parent=1 // pred_check
      _
    $region31: #{tpu_custom_call.1} parent=1 // pred_check_branch
      %331 = sbr.rel (0) target = $region33
    $region32: #{tpu_custom_call.1} parent=1 // pred_region
      %s333 = ssub.s32 128, 128
      %334 = vsyncadd [#allocation7], %s333
      %s335 = sshll.u32 [#allocation10], 4
      %s336 = int_to_ptr.vmem [resolvable:$true] %s335
      %341 = dma.vmem_to_hbm [thread:$0]  %s336, 128, %s3, [#allocation7], 64, 64, 4
    $region33: #{tpu_custom_call.1} parent=1 // pred_fallthru
      _
    // Predicated region
    $region34: #{tpu_custom_call.1} parent=1 // pred_check
      _
    $region35: #{tpu_custom_call.1} parent=1 // pred_check_branch
      %343 = sbr.rel (0) target = $region37
    $region36: #{tpu_custom_call.1} parent=1 // pred_region
      %s345 = ssub.s32 128, 128
      %346 = vsyncadd [#allocation12], %s345
      %s347 = sshll.u32 [#allocation11], 4
      %s348 = int_to_ptr.vmem [resolvable:$true] %s347
      %353 = dma.vmem_to_hbm [thread:$0]  %s348, 128, %s4, [#allocation12], 64, 64, 4
    $region37: #{tpu_custom_call.1} parent=1 // pred_fallthru
      _
    // Predicated region
    $region38: #{tpu_custom_call.1} parent=1 // pred_check
      _
    $region39: #{tpu_custom_call.1} parent=1 // pred_check_branch
      %355 = sbr.rel (0) target = $region41
    $region40: #{tpu_custom_call.1} parent=1 // pred_region
      %s357 = ssub.s32 128, 128
      %358 = vsyncadd [#allocation12], %s357
      %s359 = sshll.u32 [#allocation13], 4
      %s360 = int_to_ptr.vmem [resolvable:$true] %s359
      %365 = dma.vmem_to_hbm [thread:$0]  %s360, 128, %s5, [#allocation12], 64, 64, 4
    $region41: #{tpu_custom_call.1} parent=1 // pred_fallthru
      _
    // Predicated region
    $region42: #{tpu_custom_call.1} parent=1 // pred_check
      _
    $region43: #{tpu_custom_call.1} parent=1 // pred_check_branch
      %367 = sbr.rel (0) target = $region45
    $region44: #{tpu_custom_call.1} parent=1 // pred_region
      %368 = dma.done [#allocation7], 128
    $region45: #{tpu_custom_call.1} parent=1 // pred_fallthru
      _
    // Predicated region
    $region46: #{tpu_custom_call.1} parent=1 // pred_check
      _
    $region47: #{tpu_custom_call.1} parent=1 // pred_check_branch
      %370 = sbr.rel (0) target = $region49
    $region48: #{tpu_custom_call.1} parent=1 // pred_region
      %371 = dma.done [#allocation12], 128
    $region49: #{tpu_custom_call.1} parent=1 // pred_fallthru
      _
    // Predicated region
    $region50: #{tpu_custom_call.1} parent=1 // pred_check
      _
    $region51: #{tpu_custom_call.1} parent=1 // pred_check_branch
      %373 = sbr.rel (0) target = $region53
    $region52: #{tpu_custom_call.1} parent=1 // pred_region
      %374 = dma.done [#allocation12], 128
    $region53: #{tpu_custom_call.1} parent=1 // pred_fallthru
      _
    %375 = vsyncpa [#allocation6], 1
    %376 = vsyncpa [#allocation9], 1
    %377 = vsyncpa [#allocation7], 1
    %378 = vsyncpa [#allocation12], 1

</llo_original>
